<compile_context>
chip_gen: v5e
topology: v5e:2x2
jax: 0.10.0
libtpu: 0.0.40
codegen_flags: <defaults>
</compile_context>

<pallas_src>
import jax
import jax.numpy as jnp
from jax.experimental import pallas as pl
from jax.experimental.pallas import tpu as pltpu


def _reparam_concat_kernel(mu_ref, logvar_ref, eps_ref, ctrl_ref, out_ref):
    """out[:, :dz] = mu + exp(0.5*logvar)*eps ;  out[:, dz:] = ctrl."""
    dz = mu_ref.shape[-1]
    mu = mu_ref[...].astype(jnp.float32)
    logvar = logvar_ref[...].astype(jnp.float32)
    eps = eps_ref[...].astype(jnp.float32)
    # exp lowers to the EUP slot (otherwise idle in this kernel) -> ~free.
    z = mu + jnp.exp(0.5 * logvar) * eps
    out_ref[:, :dz] = z.astype(out_ref.dtype)
    out_ref[:, dz:] = ctrl_ref[...].astype(out_ref.dtype)


def _pick_row_tile(batch: int, dz: int, dc: int, itemsize: int,
                   vmem_budget_bytes: int = 24 * 1024 * 1024) -> int:
    """Largest 8-aligned row tile s.t. the double-buffered tiles of
    (mu, logvar, eps, ctrl, out) fit the budget. Budget chosen so the same
    source is safe on v7x (64 MiB physical VMEM) as well as v5e/v6e (128 MiB).
    """
    per_row = 2 * itemsize * (3 * dz + dc + (dz + dc))  # 2 pipeline buffers
    tb = max(8, vmem_budget_bytes // max(per_row, 1))
    tb = min(tb, 1024)               # diminishing returns beyond ~1K rows
    tb = (tb // 8) * 8               # sublane-aligned rows -> fully packed vregs
    if tb >= batch:
        return batch                 # single block == full array dims (always legal)
    return max(8, tb)


def controlled_reparametrize(mu: jax.Array,
                             logvar: jax.Array,
                             ctrl: jax.Array,
                             eps: jax.Array) -> jax.Array:
    """Pallas-backed forward of ControlledReparametrizer.

    mu, logvar, eps: [..., dz]; ctrl: [..., dc] -> out: [..., dz + dc].
    """
    assert mu.shape == logvar.shape == eps.shape
    assert mu.shape[:-1] == ctrl.shape[:-1]

    lead = mu.shape[:-1]
    dz = mu.shape[-1]
    dc = ctrl.shape[-1]
    out_dtype = mu.dtype
    itemsize = jnp.dtype(out_dtype).itemsize

    # Flatten leading dims into one row axis (pure view; no data movement).
    b = 1
    for d in lead:
        b *= d
    mu2 = mu.reshape(b, dz)
    logvar2 = logvar.reshape(b, dz)
    eps2 = eps.reshape(b, dz)
    ctrl2 = ctrl.reshape(b, dc)

    tb = _pick_row_tile(b, dz, dc, itemsize)
    grid = (pl.cdiv(b, tb),)

    z_spec = pl.BlockSpec((tb, dz), lambda i: (i, 0))
    c_spec = pl.BlockSpec((tb, dc), lambda i: (i, 0))
    o_spec = pl.BlockSpec((tb, dz + dc), lambda i: (i, 0))

    out = pl.pallas_call(
        _reparam_concat_kernel,
        out_shape=jax.ShapeDtypeStruct((b, dz + dc), out_dtype),
        grid_spec=pltpu.PrefetchScalarGridSpec(
            num_scalar_prefetch=0,
            grid=grid,
            in_specs=[z_spec, z_spec, z_spec, c_spec],  # mu, logvar, eps, ctrl
            out_specs=o_spec,                           # fused [z | ctrl]
        ),
        compiler_params=pltpu.CompilerParams(
            # Rows are independent -> shard grid across both v7x TensorCores
            # (no-op on single-TC v5e/v6e).
            dimension_semantics=("parallel",),
            # Explicit scoped-VMEM limit with headroom; tiles budgeted at 24 MiB.
            vmem_limit_bytes=48 * 1024 * 1024,
        ),
        cost_estimate=pl.CostEstimate(
            flops=3 * b * dz,
            transcendentals=b * dz,
            bytes_accessed=(3 * dz + dc + (dz + dc)) * b * itemsize,
        ),
    )(mu2, logvar2, eps2, ctrl2)

    return out.reshape(*lead, dz + dc)


if __name__ == "__main__":
    # Small, deterministic example shapes consistent with the module's forward:
    #   mu, logvar: [batch, latent_dim]; ctrl: [batch, ctrl_dim]
    batch, latent_dim, ctrl_dim = 2, 32, 16

    key = jax.random.PRNGKey(0)
    k_mu, k_lv, k_ctrl, k_eps = jax.random.split(key, 4)

    mu = jax.random.normal(k_mu, (batch, latent_dim), dtype=jnp.float32)
    logvar = jax.random.normal(k_lv, (batch, latent_dim), dtype=jnp.float32)
    ctrl = jax.random.normal(k_ctrl, (batch, ctrl_dim), dtype=jnp.float32)
    # TODO(synk): the PyTorch prior module samples eps internally (torch.randn);
    # here it is sampled outside the kernel via jax.random and passed in.
    eps = jax.random.normal(k_eps, (batch, latent_dim), dtype=jnp.float32)

    out = controlled_reparametrize(mu, logvar, ctrl, eps)
    out = jax.block_until_ready(out)

    # Pure-JAX reference for sanity checking the kernel.
    ref = jnp.concatenate([mu + jnp.exp(0.5 * logvar) * eps, ctrl], axis=-1)
    assert out.shape == (batch, latent_dim + ctrl_dim)
    assert jnp.allclose(out, ref, atol=1e-6, rtol=1e-6)

    print("KERNEL_OK")
</pallas_src>

<mosaic_0001>
module attributes {stable_mosaic.version = 11 : i64} {
  func.func @_reparam_concat_kernel(%arg0: i32, %arg1: memref<2x32xf32, #tpu.memory_space<vmem>>, %arg2: memref<2x32xf32, #tpu.memory_space<vmem>>, %arg3: memref<2x32xf32, #tpu.memory_space<vmem>>, %arg4: memref<2x16xf32, #tpu.memory_space<vmem>>, %arg5: memref<2x48xf32, #tpu.memory_space<vmem>>) attributes {dimension_semantics = [#tpu.dimension_semantics<parallel>], iteration_bounds = array<i64: 1>, scalar_prefetch = 0 : i64, scratch_operands = 0 : i64, tpu.core_type = #tpu.core_type<tc>, window_params = [{transform_indices = @transform_0, window_bounds = array<i64: 2, 32>}, {transform_indices = @transform_1, window_bounds = array<i64: 2, 32>}, {transform_indices = @transform_2, window_bounds = array<i64: 2, 32>}, {transform_indices = @transform_3, window_bounds = array<i64: 2, 16>}, {transform_indices = @transform_4, window_bounds = array<i64: 2, 48>}]} {
    %c0 = arith.constant 0 : index
    %c0_0 = arith.constant 0 : index
    %0 = vector.load %arg1[%c0, %c0_0] : memref<2x32xf32, #tpu.memory_space<vmem>>, vector<2x32xf32>
    %c0_1 = arith.constant 0 : index
    %c0_2 = arith.constant 0 : index
    %1 = vector.load %arg2[%c0_1, %c0_2] : memref<2x32xf32, #tpu.memory_space<vmem>>, vector<2x32xf32>
    %c0_3 = arith.constant 0 : index
    %c0_4 = arith.constant 0 : index
    %2 = vector.load %arg3[%c0_3, %c0_4] : memref<2x32xf32, #tpu.memory_space<vmem>>, vector<2x32xf32>
    %cst = arith.constant 5.000000e-01 : f32
    %3 = vector.broadcast %cst : f32 to vector<2x32xf32>
    %4 = arith.mulf %3, %1 : vector<2x32xf32>
    %5 = math.exp %4 : vector<2x32xf32>
    %6 = arith.mulf %5, %2 : vector<2x32xf32>
    %7 = arith.addf %0, %6 : vector<2x32xf32>
    %c0_5 = arith.constant 0 : index
    %c0_6 = arith.constant 0 : index
    %8 = vector.load %arg5[%c0_5, %c0_6] : memref<2x48xf32, #tpu.memory_space<vmem>>, vector<2x32xf32>
    tpu.vector_store %arg5[%c0_5, %c0_6], %7 {strides = array<i32>} : memref<2x48xf32, #tpu.memory_space<vmem>>, vector<2x32xf32>,
    %c0_7 = arith.constant 0 : index
    %c0_8 = arith.constant 0 : index
    %9 = vector.load %arg4[%c0_7, %c0_8] : memref<2x16xf32, #tpu.memory_space<vmem>>, vector<2x16xf32>
    %c0_9 = arith.constant 0 : index
    %c32 = arith.constant 32 : index
    %10 = vector.load %arg5[%c0_9, %c32] : memref<2x48xf32, #tpu.memory_space<vmem>>, vector<2x16xf32>
    tpu.vector_store %arg5[%c0_9, %c32], %9 {strides = array<i32>} : memref<2x48xf32, #tpu.memory_space<vmem>>, vector<2x16xf32>,
    return
  }
  func.func @transform_0(%arg0: i32) -> (i32, i32) {
    %c0_i32 = arith.constant 0 : i32
    %c0_i32_0 = arith.constant 0 : i32
    return %arg0, %c0_i32 : i32, i32
  }
  func.func @transform_1(%arg0: i32) -> (i32, i32) {
    %c0_i32 = arith.constant 0 : i32
    %c0_i32_0 = arith.constant 0 : i32
    return %arg0, %c0_i32 : i32, i32
  }
  func.func @transform_2(%arg0: i32) -> (i32, i32) {
    %c0_i32 = arith.constant 0 : i32
    %c0_i32_0 = arith.constant 0 : i32
    return %arg0, %c0_i32 : i32, i32
  }
  func.func @transform_3(%arg0: i32) -> (i32, i32) {
    %c0_i32 = arith.constant 0 : i32
    %c0_i32_0 = arith.constant 0 : i32
    return %arg0, %c0_i32 : i32, i32
  }
  func.func @transform_4(%arg0: i32) -> (i32, i32) {
    %c0_i32 = arith.constant 0 : i32
    %c0_i32_0 = arith.constant 0 : i32
    return %arg0, %c0_i32 : i32, i32
  }
}

</mosaic_0001>

<llo_original>
// kernel: tpu_custom_call.1
$region0: #{tpu_custom_call.1}
  #allocation0 [shape = 'u32[]', space=smem, size = 0x4, offset = 0x4, fixed_abs, tag = 'smem constant byte address 0x4 - core index']
  #allocation1 [shape = 'u32[72,128]{1,0:T(1,128)}', space=vmem, size = 0x9000, scoped, tag = 'internal scratch']
  %s0 = inlined_call_operand.hbm [shape: f32[2,32], index: 0, kind: input, shape index: {}]
  %s1 = inlined_call_operand.hbm [shape: f32[2,32], index: 1, kind: input, shape index: {}]
  %s2 = inlined_call_operand.hbm [shape: f32[2,32], index: 2, kind: input, shape index: {}]
  %s3 = inlined_call_operand.vmem [shape: f32[2,16], index: 3, kind: input, shape index: {}]
  %s4 = inlined_call_operand.hbm [shape: f32[2,48], index: 4, kind: output, shape index: {}]
  %s5 = sld [smem:[#allocation0]]
  $region38: #{tpu_custom_call.1} parent=0
    _
  %s7 = ssub.s32 1, %s5
  %s8 = scalar_select 0, %s7, %s5
  $region1: #{tpu_custom_call.1} parent=0
    #allocation2 [shape = 'u8[1024]{0}', space=vmem, size = 0x400, scoped, tag = 'input window, operand 0, single buffered']
    #allocation3 [shape = 's32[1]{0}', space=sflag, size = 0x4, scoped, tag = 'scoped memory for tpu_custom_call.1']
    #allocation4 [shape = 's32[1]{0}', space=sflag, size = 0x4, scoped, tag = 'scoped memory for tpu_custom_call.1']
    #allocation5 [shape = 'u8[1024]{0}', space=vmem, size = 0x400, scoped, tag = 'input window, operand 1, single buffered']
    #allocation6 [shape = 's32[1]{0}', space=sflag, size = 0x4, scoped, tag = 'scoped memory for tpu_custom_call.1']
    #allocation7 [shape = 'u8[1024]{0}', space=vmem, size = 0x400, scoped, tag = 'input window, operand 2, single buffered']
    #allocation8 [shape = 'u8[1024]{0}', space=vmem, size = 0x400, scoped, tag = 'output window, operand 0, single buffered']
    %9 = vsyncpa [#allocation3], 0
    %10 = vsyncpa [#allocation6], 0
    %11 = vsyncpa [#allocation4], 0
    // Predicated region
    $region2: #{tpu_custom_call.1} parent=1 // pred_check
      _
    $region3: #{tpu_custom_call.1} parent=1 // pred_check_branch
      %13 = sbr.rel (0) target = $region5
    $region4: #{tpu_custom_call.1} parent=1 // pred_region
      %15 = vsyncadd [#allocation3], 0
      %s17 = sshll.u32 %s0, 4
      %s18 = int_to_ptr.hbm [resolvable:$true] %s17
      %s19 = sshll.u32 [#allocation2], 4
      %s20 = int_to_ptr.vmem [resolvable:$true] %s19
      %22 = dma.hbm_to_vmem [thread:$0]  %s18, 32, %s20, [#allocation3]
    $region5: #{tpu_custom_call.1} parent=1 // pred_fallthru
      _
    // Predicated region
    $region6: #{tpu_custom_call.1} parent=1 // pred_check
      _
    $region7: #{tpu_custom_call.1} parent=1 // pred_check_branch
      %24 = sbr.rel (0) target = $region9
    $region8: #{tpu_custom_call.1} parent=1 // pred_region
      %26 = vsyncadd [#allocation6], 0
      %s28 = sshll.u32 %s1, 4
      %s29 = int_to_ptr.hbm [resolvable:$true] %s28
      %s30 = sshll.u32 [#allocation5], 4
      %s31 = int_to_ptr.vmem [resolvable:$true] %s30
      %33 = dma.hbm_to_vmem [thread:$0]  %s29, 32, %s31, [#allocation6]
    $region9: #{tpu_custom_call.1} parent=1 // pred_fallthru
      _
    // Predicated region
    $region10: #{tpu_custom_call.1} parent=1 // pred_check
      _
    $region11: #{tpu_custom_call.1} parent=1 // pred_check_branch
      %35 = sbr.rel (0) target = $region13
    $region12: #{tpu_custom_call.1} parent=1 // pred_region
      %37 = vsyncadd [#allocation6], 0
      %s39 = sshll.u32 %s2, 4
      %s40 = int_to_ptr.hbm [resolvable:$true] %s39
      %s41 = sshll.u32 [#allocation7], 4
      %s42 = int_to_ptr.vmem [resolvable:$true] %s41
      %44 = dma.hbm_to_vmem [thread:$0]  %s40, 32, %s42, [#allocation6]
    $region13: #{tpu_custom_call.1} parent=1 // pred_fallthru
      _
    // Predicated region
    $region14: #{tpu_custom_call.1} parent=1 // pred_check
      _
    $region15: #{tpu_custom_call.1} parent=1 // pred_check_branch
      %46 = sbr.rel (0) target = $region17
    $region16: #{tpu_custom_call.1} parent=1 // pred_region
      _
    $region17: #{tpu_custom_call.1} parent=1 // pred_fallthru
      _
    // Predicated region
    $region18: #{tpu_custom_call.1} parent=1 // pred_check
      _
    $region19: #{tpu_custom_call.1} parent=1 // pred_check_branch
      %48 = sbr.rel (0) target = $region21
    $region20: #{tpu_custom_call.1} parent=1 // pred_region
      %50 = dma.done [#allocation3], 32
    $region21: #{tpu_custom_call.1} parent=1 // pred_fallthru
      _
    // Predicated region
    $region22: #{tpu_custom_call.1} parent=1 // pred_check
      _
    $region23: #{tpu_custom_call.1} parent=1 // pred_check_branch
      %52 = sbr.rel (0) target = $region25
    $region24: #{tpu_custom_call.1} parent=1 // pred_region
      %54 = dma.done [#allocation6], 32
    $region25: #{tpu_custom_call.1} parent=1 // pred_fallthru
      _
    // Predicated region
    $region26: #{tpu_custom_call.1} parent=1 // pred_check
      _
    $region27: #{tpu_custom_call.1} parent=1 // pred_check_branch
      %56 = sbr.rel (0) target = $region29
    $region28: #{tpu_custom_call.1} parent=1 // pred_region
      %58 = dma.done [#allocation6], 32
    $region29: #{tpu_custom_call.1} parent=1 // pred_fallthru
      _
    %v59 = vld [vmem:[#allocation2] sm:$0x3]
    %v60 = vld [vmem:[#allocation5] sm:$0x3]
    %v61 = vld [vmem:[#allocation7] sm:$0x3]
    %v62 = vmul.f32 %v60, 0.5
    %v63 = vmul.f32 %v62, 1.442695
    %v64 = vpow.pop %v63
    %v65 = vmul.f32 %v64, %v61
    %v66 = vadd.f32 %v59, %v65
    %vm67 = vcmask 254976
    %68 = vst.msk [vmem:[#allocation8] sm:$0x3] %vm67, %v66
    %v69 = vld [vmem:[%s3] sm:$0x3]
    %71 = vrot.lane.b32.xlu0 %v69, 32
    %v72 = vpop.permute.xlu0 %71
    %vm74 = vcmask 386304
    %75 = vst.msk [vmem:[#allocation8] sm:$0x3] %vm74, %v72
    // Predicated region
    $region30: #{tpu_custom_call.1} parent=1 // pred_check
      _
    $region31: #{tpu_custom_call.1} parent=1 // pred_check_branch
      %77 = sbr.rel (0) target = $region33
    $region32: #{tpu_custom_call.1} parent=1 // pred_region
      %79 = vsyncadd [#allocation4], 0
      %s81 = sshll.u32 [#allocation8], 4
      %s82 = int_to_ptr.vmem [resolvable:$true] %s81
      %s83 = sshll.u32 %s4, 4
      %s84 = int_to_ptr.hbm [resolvable:$true] %s83
      %86 = dma.vmem_to_hbm [thread:$0]  %s82, 32, %s84, [#allocation4]
    $region33: #{tpu_custom_call.1} parent=1 // pred_fallthru
      _
    // Predicated region
    $region34: #{tpu_custom_call.1} parent=1 // pred_check
      _
    $region35: #{tpu_custom_call.1} parent=1 // pred_check_branch
      %88 = sbr.rel (0) target = $region37
    $region36: #{tpu_custom_call.1} parent=1 // pred_region
      %90 = dma.done [#allocation4], 32
    $region37: #{tpu_custom_call.1} parent=1 // pred_fallthru
      _
    %91 = vsyncpa [#allocation3], 1
    %92 = vsyncpa [#allocation6], 1
    %93 = vsyncpa [#allocation4], 1

</llo_original>
